<compile_context>
chip_gen: v5e
topology: v5e:2x2
jax: 0.10.0
libtpu: 0.0.40
codegen_flags: <defaults>
</compile_context>

<pallas_src>
import functools

import jax
import jax.numpy as jnp
import numpy as np
from jax.experimental import pallas as pl
from jax.experimental.pallas import tpu as pltpu


# ---------------------------------------------------------------------------
# Tile selection
# ---------------------------------------------------------------------------
_B_CANDS = (256, 128, 64, 32, 16, 8)
_T_CANDS = (4096, 2048, 1024, 512, 256, 128)
_VMEM_BUDGET = 12 * 1024 * 1024  # double-buffered f32 working-set target


def _pick_tiles(B, T, n_streams, min_itemsize=4):
    """Pick (tb, tt) block sizes.

    tb: largest candidate divisor of B that leaves >= 2 grid steps on the
        "parallel" batch axis (keeps both v7x TensorCores busy); full extent
        otherwise.  When any streamed input is a sub-32-bit dtype, tb stays a
        multiple of 32 (packed-sublane tiling) or the full extent.
    tt: largest candidate divisor of T keeping the double-buffered f32
        working set under ~12 MiB -> safely inside v5e's 16 MiB scoped-VMEM
        default as well as v6e/v7x's 32 MiB default.
    """
    tb = B
    if B >= 16:
        limit = B // 2
        for c in _B_CANDS:
            if c <= limit and B % c == 0:
                tb = c
                break
    if min_itemsize < 4 and tb != B and tb % 32 != 0:
        tb = B  # full-extent sublane dim is always a legal block dim

    tt = T
    for c in _T_CANDS:
        if c <= T and T % c == 0 and n_streams * 2 * tb * c * 4 <= _VMEM_BUDGET:
            tt = c
            break
    # TODO(synk): if T has no candidate divisor (ragged, prime T) the full
    # extent is used; pad T to a multiple of 512 on the caller side if that
    # ever exceeds the 32 MiB VMEM limit.
    return tb, tt


# ---------------------------------------------------------------------------
# Kernel 1: tiled masked entropy reduction
#   out[b, 0] = sum_t((-exp(lp-olp) * w) * mask) / sum_t(mask)
#   mode="lp"    -> w == log_probs (the 's' branch; lp is NOT read twice)
#   mode="array" -> w is a [B,T] ref (the 'n' branch with the l buffer; the
#                   scalar bias-correction divide is folded outside)
# ---------------------------------------------------------------------------
def _masked_entropy_kernel(mode, *refs):
    if mode == "array":
        lp_ref, olp_ref, mask_ref, w_ref, out_ref, num_acc, den_acc = refs
    else:  # "lp"
        lp_ref, olp_ref, mask_ref, out_ref, num_acc, den_acc = refs
        w_ref = None

    ti = pl.program_id(1)

    @pl.when(ti == 0)
    def _():
        num_acc[...] = jnp.zeros_like(num_acc)
        den_acc[...] = jnp.zeros_like(den_acc)

    lp = lp_ref[...].astype(jnp.float32)
    olp = olp_ref[...].astype(jnp.float32)
    mask = mask_ref[...].astype(jnp.float32)  # mask stays narrow in HBM

    ratio = jnp.exp(lp - olp)
    if mode == "lp":
        x = -ratio * lp
    else:  # "array"
        x = -ratio * w_ref[...].astype(jnp.float32)

    num_acc[...] += jnp.sum(x * mask, axis=-1, keepdims=True)
    den_acc[...] += jnp.sum(mask, axis=-1, keepdims=True)

    @pl.when(ti == pl.num_programs(1) - 1)
    def _():
        # Matches torch masked_mean exactly (no div-by-zero guard on purpose).
        out_ref[...] = num_acc[...] / den_acc[...]


def masked_row_entropy_mean(log_probs, old_log_probs, action_mask,
                            weight=None, mode="lp"):
    """mean_b[ masked_mean(-exp(lp-olp) * w, mask, dim=-1) ] as an f32 scalar."""
    B, T = log_probs.shape
    dts = [log_probs.dtype, old_log_probs.dtype, action_mask.dtype]
    if mode == "array":
        dts.append(weight.dtype)
    min_it = min(jnp.dtype(d).itemsize for d in dts)
    n_streams = 4 if mode == "array" else 3
    tb, tt = _pick_tiles(B, T, n_streams, min_it)
    grid = (B // tb, T // tt)

    tile = pl.BlockSpec((tb, tt), lambda bi, ti: (bi, ti))
    inputs = [log_probs, old_log_probs, action_mask]
    in_specs = [tile, tile, tile]
    if mode == "array":
        inputs.append(weight)
        in_specs.append(tile)

    row_means = pl.pallas_call(
        functools.partial(_masked_entropy_kernel, mode),
        out_shape=jax.ShapeDtypeStruct((B, 1), jnp.float32),
        grid=grid,
        in_specs=in_specs,
        out_specs=pl.BlockSpec((tb, 1), lambda bi, ti: (bi, 0)),
        scratch_shapes=[pltpu.VMEM((tb, 1), jnp.float32),
                        pltpu.VMEM((tb, 1), jnp.float32)],
        compiler_params=pltpu.CompilerParams(
            dimension_semantics=("parallel", "arbitrary"),
            vmem_limit_bytes=32 * 1024 * 1024),
    )(*inputs)
    return jnp.mean(row_means)  # tiny [B,1] -> scalar; trivial XLA op


# ---------------------------------------------------------------------------
# Kernel 2: elementwise EMA update of the running log-prob buffer
#   l_new = alpha_l * l + (1 - alpha_l) * log_probs
# ---------------------------------------------------------------------------
def _ema_scalar_kernel(alpha, l_ref, lp_ref, out_ref):
    l0 = l_ref[0]  # scalar from SMEM (no [B,T] broadcast ever hits HBM)
    out_ref[...] = (alpha * l0
                    + (1.0 - alpha) * lp_ref[...].astype(jnp.float32)
                    ).astype(out_ref.dtype)


def _ema_array_kernel(alpha, l_ref, lp_ref, out_ref):
    out_ref[...] = (alpha * l_ref[...].astype(jnp.float32)
                    + (1.0 - alpha) * lp_ref[...].astype(jnp.float32)
                    ).astype(out_ref.dtype)


def ema_update_scalar(l_buf, log_probs, alpha):
    """l_buf is a single element: pass it via SMEM."""
    B, T = log_probs.shape
    tb, tt = _pick_tiles(B, T, n_streams=2,
                         min_itemsize=jnp.dtype(log_probs.dtype).itemsize)
    grid = (B // tb, T // tt)
    tile = pl.BlockSpec((tb, tt), lambda bi, ti: (bi, ti))
    return pl.pallas_call(
        functools.partial(_ema_scalar_kernel, float(alpha)),
        out_shape=jax.ShapeDtypeStruct((B, T), log_probs.dtype),
        grid=grid,
        in_specs=[pl.BlockSpec(memory_space=pltpu.MemorySpace.SMEM), tile],
        out_specs=tile,
        compiler_params=pltpu.CompilerParams(
            dimension_semantics=("parallel", "parallel"),
            vmem_limit_bytes=32 * 1024 * 1024),
    )(jnp.reshape(l_buf, (1,)).astype(jnp.float32), log_probs)


def ema_update_array(l_buf, log_probs, alpha):
    B, T = log_probs.shape
    min_it = min(jnp.dtype(l_buf.dtype).itemsize,
                 jnp.dtype(log_probs.dtype).itemsize)
    tb, tt = _pick_tiles(B, T, n_streams=3, min_itemsize=min_it)
    grid = (B // tb, T // tt)
    tile = pl.BlockSpec((tb, tt), lambda bi, ti: (bi, ti))
    # In-place update of the l buffer (true in-place when the caller donates
    # l_buf at a jit boundary; XLA copies otherwise -> still correct).
    alias = {0: 0} if (l_buf.shape == log_probs.shape
                       and l_buf.dtype == log_probs.dtype) else {}
    return pl.pallas_call(
        functools.partial(_ema_array_kernel, float(alpha)),
        out_shape=jax.ShapeDtypeStruct((B, T), log_probs.dtype),
        grid=grid,
        in_specs=[tile, tile],
        out_specs=tile,
        input_output_aliases=alias,
        compiler_params=pltpu.CompilerParams(
            dimension_semantics=("parallel", "parallel"),
            vmem_limit_bytes=32 * 1024 * 1024),
    )(l_buf, log_probs)


# ---------------------------------------------------------------------------
# SNR module (state held as jnp arrays; zero init as in the torch buffers)
# ---------------------------------------------------------------------------
class SNR:
    def __init__(self, alpha_s=0.9, alpha_n=0.9, alpha_l=0.9, clip_eps=0.2, eps=1e-8):
        self.alpha_s = alpha_s
        self.alpha_n = alpha_n
        self.alpha_l = alpha_l
        self.clip_eps = clip_eps
        self.eps = eps
        self.global_step = 1
        self.local_step = 1
        self.s = jnp.zeros((1,), jnp.float32)
        self.n = jnp.zeros((1,), jnp.float32)
        self.l = jnp.zeros((1,), jnp.float32)

    # ---- 's' branch -------------------------------------------------------
    def update_signal(self, log_probs, old_log_probs, action_mask):
        # weight == log_probs -> 3-stream kernel (lp is not read twice)
        entropy = masked_row_entropy_mean(log_probs, old_log_probs, action_mask,
                                          mode="lp")
        self.s = self.alpha_s * self.s + (1.0 - self.alpha_s) * entropy
        return self.s / (1.0 - jnp.float32(self.alpha_s) ** self.global_step)

    # ---- 'n' branch -------------------------------------------------------
    def update_noise(self, log_probs, old_log_probs, action_mask):
        corr = 1.0 - jnp.float32(self.alpha_l) ** self.local_step
        if self.l.size == 1:
            # l is still the zero-initialized scalar buffer (only possible at
            # init or right after reset_logprobs), so -ratio * (l / corr) == 0
            # everywhere.  Skip the whole [B,T] HBM pass.
            # NOTE: a row whose mask is all zero would have produced NaN (0/0)
            # in the original math; that degenerate case is dropped here.
            entropy_average = jnp.float32(0.0)
        else:
            # l is [B,T]: fold the scalar bias-correction divide outside the
            # kernel (no [B,T] temp materialized for l / corr).
            entropy_average = masked_row_entropy_mean(
                log_probs, old_log_probs, action_mask,
                weight=self.l, mode="array") / corr
        self.n = self.alpha_n * self.n + (1.0 - self.alpha_n) * entropy_average
        return self.n / (1.0 - jnp.float32(self.alpha_n) ** self.global_step)

    # ---- 'l' branch -------------------------------------------------------
    def update_logprobs(self, log_probs):
        # TODO(synk): if the trainer always runs the 'n' (array-weight) update
        # and this 'l' update on the same log_probs in one step, a fused
        # kernel (read lp/olp/mask/l once, emit l_new + reduction partials)
        # would drop combined HBM traffic from 7 to 5 [B,T] streams.
        if self.l.shape == log_probs.shape:
            self.l = ema_update_array(self.l, log_probs, self.alpha_l)
        else:
            self.l = ema_update_scalar(self.l, log_probs, self.alpha_l)

    # ---- bookkeeping (plain scalars, as in torch) --------------------------
    def update_global_step(self):
        self.global_step += 1

    def update_local_step(self):
        self.local_step += 1

    def reset_logprobs(self):
        self.local_step = 1
        self.l = jnp.zeros((1,), jnp.float32)

    def __call__(self, update_type, log_probs, old_log_probs=None, action_mask=None):
        if update_type == 's':
            return self.update_signal(log_probs, old_log_probs, action_mask)
        if update_type == 'n':
            return self.update_noise(log_probs, old_log_probs, action_mask)
        if update_type == 'l':
            self.update_logprobs(log_probs)
            return None


# ---------------------------------------------------------------------------
# Pure-JAX reference (mirrors the torch math) for a silent correctness check
# ---------------------------------------------------------------------------
def _ref_masked_entropy(lp, olp, w, mask):
    mask = mask.astype(jnp.float32)
    ratio = jnp.exp(lp - olp)
    x = -ratio * w
    row = jnp.sum(x * mask, axis=-1) / jnp.sum(mask, axis=-1)
    return jnp.mean(row)


if __name__ == "__main__":
    B, T = 4, 128
    key = jax.random.PRNGKey(0)
    k1, k2 = jax.random.split(key, 2)

    # log-probs are negative; mask out the tail of each row.  The mask is
    # kept in int8 (the kernels upcast in VMEM) -> 4x fewer mask bytes in HBM.
    log_probs = -jax.nn.softplus(jax.random.normal(k1, (B, T), jnp.float32))
    old_log_probs = -jax.nn.softplus(jax.random.normal(k2, (B, T), jnp.float32))
    lens = jnp.array([T, T - 16, T // 2, T - 5])
    action_mask = (jnp.arange(T)[None, :] < lens[:, None]).astype(jnp.int8)

    snr = SNR()

    # 's' branch: 3-stream reduction kernel (w == lp handled in-kernel).
    s_corr = jax.block_until_ready(snr("s", log_probs, old_log_probs, action_mask))

    # 'n' branch with the scalar zero-init l buffer: short-circuited (no kernel).
    n_corr0 = jax.block_until_ready(snr("n", log_probs, old_log_probs, action_mask))

    # 'l' branch twice: first the SMEM-scalar EMA kernel, then the aliased
    # array EMA kernel.
    snr("l", log_probs)
    snr("l", old_log_probs)
    l_buf = jax.block_until_ready(snr.l)

    # 'n' branch again, now with the [B,T] l buffer (4-stream array-weight kernel).
    n_corr1 = jax.block_until_ready(snr("n", log_probs, old_log_probs, action_mask))

    # ------- reference check (plain JAX, same math / same state sequence) -------
    a_s = a_n = a_l = 0.9
    ref_s = (1.0 - a_s) * _ref_masked_entropy(log_probs, old_log_probs,
                                              log_probs, action_mask)
    ref_s_corr = ref_s / (1.0 - a_s ** 1)

    # first 'n': l == 0 -> logprobs_average == 0 -> entropy_average == 0
    ref_n0 = (1.0 - a_n) * 0.0
    ref_n0_corr = ref_n0 / (1.0 - a_n ** 1)

    # two 'l' updates
    ref_l1 = (1.0 - a_l) * log_probs
    ref_l2 = a_l * ref_l1 + (1.0 - a_l) * old_log_probs

    # second 'n': l is now [B,T]
    ref_lavg = ref_l2 / (1.0 - a_l ** 1)
    ref_ent1 = _ref_masked_entropy(log_probs, old_log_probs, ref_lavg, action_mask)
    ref_n1 = a_n * ref_n0 + (1.0 - a_n) * ref_ent1
    ref_n1_corr = ref_n1 / (1.0 - a_n ** 1)

    np.testing.assert_allclose(np.asarray(l_buf), np.asarray(ref_l2),
                               rtol=1e-5, atol=1e-6)
    np.testing.assert_allclose(np.asarray(s_corr).ravel(),
                               np.asarray(ref_s_corr).ravel(), rtol=1e-5, atol=1e-6)
    np.testing.assert_allclose(np.asarray(n_corr0).ravel(),
                               np.asarray(ref_n0_corr).ravel(), rtol=1e-5, atol=1e-6)
    np.testing.assert_allclose(np.asarray(n_corr1).ravel(),
                               np.asarray(ref_n1_corr).ravel(), rtol=1e-5, atol=1e-5)

    print("KERNEL_OK")
</pallas_src>

<mosaic_0001>
module attributes {stable_mosaic.version = 11 : i64} {
  func.func @_masked_entropy_kernel(%arg0: i32, %arg1: i32, %arg2: memref<4x128xf32, #tpu.memory_space<vmem>>, %arg3: memref<4x128xf32, #tpu.memory_space<vmem>>, %arg4: memref<4x128xi8, #tpu.memory_space<vmem>>, %arg5: memref<4x1xf32, #tpu.memory_space<vmem>>, %arg6: memref<4x1xf32, #tpu.memory_space<vmem>>, %arg7: memref<4x1xf32, #tpu.memory_space<vmem>>) attributes {dimension_semantics = [#tpu.dimension_semantics<parallel>, #tpu.dimension_semantics<arbitrary>], iteration_bounds = array<i64: 1, 1>, scalar_prefetch = 0 : i64, scratch_operands = 2 : i64, tpu.core_type = #tpu.core_type<tc>, window_params = [{transform_indices = @transform_0, window_bounds = array<i64: 4, 128>}, {transform_indices = @transform_1, window_bounds = array<i64: 4, 128>}, {transform_indices = @transform_2, window_bounds = array<i64: 4, 128>}, {transform_indices = @transform_3, window_bounds = array<i64: 4, 1>}]} {
    %c0_i32 = arith.constant 0 : i32
    %0 = arith.cmpi eq, %arg1, %c0_i32 : i32
    %1 = arith.extui %0 : i1 to i32
    %c0_i32_0 = arith.constant 0 : i32
    %2 = arith.cmpi ne, %1, %c0_i32_0 : i32
    scf.if %2 {
      %cst_18 = arith.constant 0.000000e+00 : f32
      %26 = vector.broadcast %cst_18 : f32 to vector<4x1xf32>
      %c0_19 = arith.constant 0 : index
      %c0_20 = arith.constant 0 : index
      %27 = vector.load %arg6[%c0_19, %c0_20] : memref<4x1xf32, #tpu.memory_space<vmem>>, vector<4x1xf32>
      tpu.vector_store %arg6[%c0_19, %c0_20], %26 {strides = array<i32>} : memref<4x1xf32, #tpu.memory_space<vmem>>, vector<4x1xf32>,
      %cst_21 = arith.constant 0.000000e+00 : f32
      %28 = vector.broadcast %cst_21 : f32 to vector<4x1xf32>
      %c0_22 = arith.constant 0 : index
      %c0_23 = arith.constant 0 : index
      %29 = vector.load %arg7[%c0_22, %c0_23] : memref<4x1xf32, #tpu.memory_space<vmem>>, vector<4x1xf32>
      tpu.vector_store %arg7[%c0_22, %c0_23], %28 {strides = array<i32>} : memref<4x1xf32, #tpu.memory_space<vmem>>, vector<4x1xf32>,
    } else {
    }
    %c0 = arith.constant 0 : index
    %c0_1 = arith.constant 0 : index
    %3 = vector.load %arg2[%c0, %c0_1] : memref<4x128xf32, #tpu.memory_space<vmem>>, vector<4x128xf32>
    %c0_2 = arith.constant 0 : index
    %c0_3 = arith.constant 0 : index
    %4 = vector.load %arg3[%c0_2, %c0_3] : memref<4x128xf32, #tpu.memory_space<vmem>>, vector<4x128xf32>
    %c0_4 = arith.constant 0 : index
    %c0_5 = arith.constant 0 : index
    %5 = vector.load %arg4[%c0_4, %c0_5] : memref<4x128xi8, #tpu.memory_space<vmem>>, vector<4x128xi8>
    %6 = arith.sitofp %5 : vector<4x128xi8> to vector<4x128xf32>
    %7 = arith.subf %3, %4 : vector<4x128xf32>
    %8 = math.exp %7 : vector<4x128xf32>
    %cst = arith.constant 0.000000e+00 : f32
    %9 = vector.broadcast %cst : f32 to vector<4x128xf32>
    %10 = arith.subf %9, %8 : vector<4x128xf32>
    %11 = arith.mulf %10, %3 : vector<4x128xf32>
    %c0_6 = arith.constant 0 : index
    %c0_7 = arith.constant 0 : index
    %12 = vector.load %arg6[%c0_6, %c0_7] : memref<4x1xf32, #tpu.memory_space<vmem>>, vector<4x1xf32>
    %13 = arith.mulf %11, %6 : vector<4x128xf32>
    %cst_8 = arith.constant dense<0.000000e+00> : vector<4xf32>
    %14 = vector.multi_reduction <add>, %13, %cst_8 [1] : vector<4x128xf32> to vector<4xf32>
    %15 = vector.shape_cast %14 : vector<4xf32> to vector<4x1xf32>
    %16 = arith.addf %12, %15 : vector<4x1xf32>
    %c0_9 = arith.constant 0 : index
    %c0_10 = arith.constant 0 : index
    %17 = vector.load %arg6[%c0_9, %c0_10] : memref<4x1xf32, #tpu.memory_space<vmem>>, vector<4x1xf32>
    tpu.vector_store %arg6[%c0_9, %c0_10], %16 {strides = array<i32>} : memref<4x1xf32, #tpu.memory_space<vmem>>, vector<4x1xf32>,
    %c0_11 = arith.constant 0 : index
    %c0_12 = arith.constant 0 : index
    %18 = vector.load %arg7[%c0_11, %c0_12] : memref<4x1xf32, #tpu.memory_space<vmem>>, vector<4x1xf32>
    %cst_13 = arith.constant dense<0.000000e+00> : vector<4xf32>
    %19 = vector.multi_reduction <add>, %6, %cst_13 [1] : vector<4x128xf32> to vector<4xf32>
    %20 = vector.shape_cast %19 : vector<4xf32> to vector<4x1xf32>
    %21 = arith.addf %18, %20 : vector<4x1xf32>
    %c0_14 = arith.constant 0 : index
    %c0_15 = arith.constant 0 : index
    %22 = vector.load %arg7[%c0_14, %c0_15] : memref<4x1xf32, #tpu.memory_space<vmem>>, vector<4x1xf32>
    tpu.vector_store %arg7[%c0_14, %c0_15], %21 {strides = array<i32>} : memref<4x1xf32, #tpu.memory_space<vmem>>, vector<4x1xf32>,
    %c0_i32_16 = arith.constant 0 : i32
    %23 = arith.cmpi eq, %arg1, %c0_i32_16 : i32
    %24 = arith.extui %23 : i1 to i32
    %c0_i32_17 = arith.constant 0 : i32
    %25 = arith.cmpi ne, %24, %c0_i32_17 : i32
    scf.if %25 {
      %c0_18 = arith.constant 0 : index
      %c0_19 = arith.constant 0 : index
      %26 = vector.load %arg6[%c0_18, %c0_19] : memref<4x1xf32, #tpu.memory_space<vmem>>, vector<4x1xf32>
      %c0_20 = arith.constant 0 : index
      %c0_21 = arith.constant 0 : index
      %27 = vector.load %arg7[%c0_20, %c0_21] : memref<4x1xf32, #tpu.memory_space<vmem>>, vector<4x1xf32>
      %28 = arith.divf %26, %27 : vector<4x1xf32>
      %c0_22 = arith.constant 0 : index
      %c0_23 = arith.constant 0 : index
      %29 = vector.load %arg5[%c0_22, %c0_23] : memref<4x1xf32, #tpu.memory_space<vmem>>, vector<4x1xf32>
      tpu.vector_store %arg5[%c0_22, %c0_23], %28 {strides = array<i32>} : memref<4x1xf32, #tpu.memory_space<vmem>>, vector<4x1xf32>,
    } else {
    }
    return
  }
  func.func @transform_0(%arg0: i32, %arg1: i32) -> (i32, i32) {
    %c0_i32 = arith.constant 0 : i32
    return %arg0, %arg1 : i32, i32
  }
  func.func @transform_1(%arg0: i32, %arg1: i32) -> (i32, i32) {
    %c0_i32 = arith.constant 0 : i32
    return %arg0, %arg1 : i32, i32
  }
  func.func @transform_2(%arg0: i32, %arg1: i32) -> (i32, i32) {
    %c0_i32 = arith.constant 0 : i32
    return %arg0, %arg1 : i32, i32
  }
  func.func @transform_3(%arg0: i32, %arg1: i32) -> (i32, i32) {
    %c0_i32 = arith.constant 0 : i32
    %c0_i32_0 = arith.constant 0 : i32
    return %arg0, %c0_i32 : i32, i32
  }
}

</mosaic_0001>

<llo_original>
// kernel: tpu_custom_call.1
$region0: #{tpu_custom_call.1}
  #allocation0 [shape = 'u32[]', space=smem, size = 0x4, offset = 0x4, fixed_abs, tag = 'smem constant byte address 0x4 - core index']
  #allocation1 [shape = 'u32[72,128]{1,0:T(1,128)}', space=vmem, size = 0x9000, scoped, tag = 'internal scratch']
  #allocation2 [shape = 'f32[4,1]{1,0:T(4,128)}', space=vmem, size = 0x800, scoped, tag = 'scratch operand']
  #allocation3 [shape = 'f32[4,1]{1,0:T(4,128)}', space=vmem, size = 0x800, scoped, tag = 'scratch operand']
  %s0 = inlined_call_operand.hbm [shape: f32[4,128], index: 0, kind: input, shape index: {}]
  %s1 = inlined_call_operand.hbm [shape: f32[4,128], index: 1, kind: input, shape index: {}]
  %s2 = inlined_call_operand.vmem [shape: s8[4,128], index: 2, kind: input, shape index: {}]
  %s3 = inlined_call_operand.vmem [shape: f32[4,1], index: 3, kind: output, shape index: {}]
  %s4 = sld [smem:[#allocation0]]
  $region38: #{tpu_custom_call.1} parent=0
    _
  %s6 = ssub.s32 1, %s4
  %s7 = scalar_select 0, %s6, %s4
  $region1: #{tpu_custom_call.1} parent=0
    #allocation4 [shape = 'u8[2048]{0}', space=vmem, size = 0x800, scoped, tag = 'input window, operand 0, single buffered']
    #allocation5 [shape = 's32[1]{0}', space=sflag, size = 0x4, scoped, tag = 'scoped memory for tpu_custom_call.1']
    #allocation6 [shape = 'u8[2048]{0}', space=vmem, size = 0x800, scoped, tag = 'input window, operand 1, single buffered']
    #allocation7 [shape = 's32[1]{0}', space=sflag, size = 0x4, scoped, tag = 'scoped memory for tpu_custom_call.1']
    %8 = vsyncpa [#allocation5], 0
    %9 = vsyncpa [#allocation7], 0
    // Predicated region
    $region2: #{tpu_custom_call.1} parent=1 // pred_check
      _
    $region3: #{tpu_custom_call.1} parent=1 // pred_check_branch
      %11 = sbr.rel (0) target = $region5
    $region4: #{tpu_custom_call.1} parent=1 // pred_region
      %13 = vsyncadd [#allocation5], 0
      %s15 = sshll.u32 %s0, 4
      %s16 = int_to_ptr.hbm [resolvable:$true] %s15
      %s17 = sshll.u32 [#allocation4], 4
      %s18 = int_to_ptr.vmem [resolvable:$true] %s17
      %20 = dma.hbm_to_vmem [thread:$0]  %s16, 64, %s18, [#allocation5]
    $region5: #{tpu_custom_call.1} parent=1 // pred_fallthru
      _
    // Predicated region
    $region6: #{tpu_custom_call.1} parent=1 // pred_check
      _
    $region7: #{tpu_custom_call.1} parent=1 // pred_check_branch
      %22 = sbr.rel (0) target = $region9
    $region8: #{tpu_custom_call.1} parent=1 // pred_region
      %24 = vsyncadd [#allocation7], 0
      %s26 = sshll.u32 %s1, 4
      %s27 = int_to_ptr.hbm [resolvable:$true] %s26
      %s28 = sshll.u32 [#allocation6], 4
      %s29 = int_to_ptr.vmem [resolvable:$true] %s28
      %31 = dma.hbm_to_vmem [thread:$0]  %s27, 64, %s29, [#allocation7]
    $region9: #{tpu_custom_call.1} parent=1 // pred_fallthru
      _
    // Predicated region
    $region10: #{tpu_custom_call.1} parent=1 // pred_check
      _
    $region11: #{tpu_custom_call.1} parent=1 // pred_check_branch
      %33 = sbr.rel (0) target = $region13
    $region12: #{tpu_custom_call.1} parent=1 // pred_region
      _
    $region13: #{tpu_custom_call.1} parent=1 // pred_fallthru
      _
    // Predicated region
    $region14: #{tpu_custom_call.1} parent=1 // pred_check
      _
    $region15: #{tpu_custom_call.1} parent=1 // pred_check_branch
      %35 = sbr.rel (0) target = $region17
    $region16: #{tpu_custom_call.1} parent=1 // pred_region
      %37 = dma.done [#allocation5], 64
    $region17: #{tpu_custom_call.1} parent=1 // pred_fallthru
      _
    // Predicated region
    $region18: #{tpu_custom_call.1} parent=1 // pred_check
      _
    $region19: #{tpu_custom_call.1} parent=1 // pred_check_branch
      %39 = sbr.rel (0) target = $region21
    $region20: #{tpu_custom_call.1} parent=1 // pred_region
      %41 = dma.done [#allocation7], 64
    $region21: #{tpu_custom_call.1} parent=1 // pred_fallthru
      _
    %p42 = scmp.eq.s32.totalorder 0, 0
    // Predicated region
    $region22: #{tpu_custom_call.1} parent=1 // pred_check
      %p43 = pneg %p42
    $region23: #{tpu_custom_call.1} parent=1 // pred_check_branch
      %45 = sbr.rel (%p43) target = $region25
    $region24: #{tpu_custom_call.1} parent=1 // pred_region
      %vm46 = vcmask 3072
      %47 = vst.msk [vmem:[#allocation2] sm:$0xf] %vm46, 0.0
      %48 = vst.msk [vmem:[#allocation3] sm:$0xf] %vm46, 0.0
    $region25: #{tpu_custom_call.1} parent=1 // pred_fallthru
      _
    %v49 = vld [vmem:[#allocation4] sm:$0xf]
    %v50 = vld [vmem:[#allocation6] sm:$0xf]
    %v51 = vld [vmem:[%s2] sm:$0x1]
    %v52 = vunpack.c.0.s8 %v51
    %v53 = vcvt.s32.f32 %v52
    %v54 = vsub.f32 %v49, %v50
    %v55 = vmul.f32 %v54, 1.442695
    %v56 = vpow.pop %v55
    %v57 = vsub.f32 0.0, %v56
    %v58 = vmul.f32 %v57, %v49
    %v59 = vld [vmem:[#allocation2] sm:$0xf]
    %v60 = vmul.f32 %v58, %v53
    %vm61 = vcmask 1043456
    %v62 = vsel %vm61, %v60, 0.0
    %63 = vadd.xlane.f32.xlu0 %v62
    %v64 = vpop.xlane.xlu0 %63
    %v65 = vadd.f32 %v59, %v64
    %vm66 = vcmask 3072
    %67 = vst.msk [vmem:[#allocation2] sm:$0xf] %vm66, %v65
    %v68 = vld [vmem:[#allocation3] sm:$0xf]
    %v69 = vsel %vm61, %v53, 0.0
    %70 = vadd.xlane.f32.xlu0 %v69
    %v71 = vpop.xlane.xlu0 %70
    %v72 = vadd.f32 %v68, %v71
    %73 = vst.msk [vmem:[#allocation3] sm:$0xf] %vm66, %v72
    // Predicated region
    $region26: #{tpu_custom_call.1} parent=1 // pred_check
      %p74 = pneg %p42
    $region27: #{tpu_custom_call.1} parent=1 // pred_check_branch
      %76 = sbr.rel (%p74) target = $region29
    $region28: #{tpu_custom_call.1} parent=1 // pred_region
      %v77 = vld [vmem:[#allocation2] sm:$0xf]
      %v78 = vld [vmem:[#allocation3] sm:$0xf]
      %v79 = vrcp.pop %v78
      %v80 = vmul.f32 %v78, %v79
      %v81 = vsub.f32 1.0, %v80
      %v82 = vmul.f32 %v79, %v81
      %v83 = vadd.f32 %v79, %v82
      %vm84 = vweird.f32 %v78
      %vm85 = vweird.f32 %v79
      %vm86 = vmor %vm84, %vm85
      %v87 = vsel %vm86, %v79, %v83
      %v88 = vand.u32 2147483647, %v78
      %vm89 = vcmp.eq.f32.partialorder %v88, 8.507059e+37
      %v90 = vand.u32 %v78, 2147483648
      %v91 = vor.u32 1.1754944e-38, %v90
      %v92 = vsel %vm89, %v91, %v87
      %v93 = vmul.f32 %v77, %v92
      %94 = vst.msk [vmem:[%s3] sm:$0xf] %vm66, %v93
    $region29: #{tpu_custom_call.1} parent=1 // pred_fallthru
      _
    // Predicated region
    $region30: #{tpu_custom_call.1} parent=1 // pred_check
      _
    $region31: #{tpu_custom_call.1} parent=1 // pred_check_branch
      %96 = sbr.rel (0) target = $region33
    $region32: #{tpu_custom_call.1} parent=1 // pred_region
      _
    $region33: #{tpu_custom_call.1} parent=1 // pred_fallthru
      _
    // Predicated region
    $region34: #{tpu_custom_call.1} parent=1 // pred_check
      _
    $region35: #{tpu_custom_call.1} parent=1 // pred_check_branch
      %98 = sbr.rel (0) target = $region37
    $region36: #{tpu_custom_call.1} parent=1 // pred_region
      _
    $region37: #{tpu_custom_call.1} parent=1 // pred_fallthru
      _
    %99 = vsyncpa [#allocation5], 1
    %100 = vsyncpa [#allocation7], 1

</llo_original>
